<compile_context>
chip_gen: v7x
topology: tpu7x:2x2x1
jax: 0.10.0
libtpu: 0.0.40
codegen_flags: <defaults>
</compile_context>

<pallas_src>
import math

import jax
import jax.numpy as jnp
from jax import lax
from jax.experimental import pallas as pl
from jax.experimental.pallas import tpu as pltpu

LOG2 = math.log(2.0)

_MAX_TILE_B = 8192   # peak VMEM ~6 MB at this tile -> fits v5e's 16 MiB scoped default


def _softplus(x):
    # numerically stable softplus (1 exp + 1 log per element on the EUP)
    return jnp.logaddexp(0.0, x)


def _lncosh(x):
    # lncosh(x) = -x + softplus(2x) - log(2)   (stable for both signs)
    return -x + _softplus(2.0 * x) - LOG2


def mlp_kernel(x_ref, w1_ref, w2_ref, b2_ref, w3_ref, o_ref):
    # x_ref:  (TB, dim)        f32   input rows; cast to bf16 in VMEM
    # w1_ref: (hidden, dim)    bf16  fc1.weight (PyTorch (out, in) layout, bias-free)
    # w2_ref: (hidden, hidden) bf16  fc2.weight
    # b2_ref: (hidden, 1)      f32   fc2.bias as a column
    # w3_ref: (hidden, 1)      f32   fc3.weight as a column (bias-free)
    # o_ref:  (1, TB)          f32   lane-dense output row (== fc3(out).sum(dim=1))
    x_bf = x_ref[...].astype(jnp.bfloat16)

    # fc1 in batch-in-lanes form: h1t[h, b] = sum_d w1[h, d] * x[b, d]
    # (contract the minor dim of both operands, same pattern as q @ k^T in attention)
    h1t = lax.dot_general(
        w1_ref[...], x_bf,
        dimension_numbers=(((1,), (1,)), ((), ())),
        preferred_element_type=jnp.float32)                       # (hidden, TB)
    a1t = _lncosh(h1t)
    # TODO(synk): on v6e/v7x the lncosh/softplus could run in bf16 on the EUP (~2x on
    # that slot); kept f32 so the same kernel is correct on v5e (no bf16 VPU/EUP path).

    # fc2 + bias + softplus: h2t = W2 @ a1t + b2   (bf16 MXU operands, f32 accumulate)
    h2t = jnp.dot(w2_ref[...], a1t.astype(jnp.bfloat16),
                  preferred_element_type=jnp.float32) + b2_ref[...]
    a2t = _softplus(h2t)                                          # (hidden, TB)

    # fc3 (hidden -> 1) followed by .sum(dim=1): a width-1 matmul would waste the MXU;
    # do a VPU multiply + cross-sublane (XLU) reduce -> one dense (1, TB) store.
    o_ref[...] = jnp.sum(a2t * w3_ref[...], axis=0, keepdims=True)


def _round_up(n, m):
    return -(-n // m) * m


def _pick_tile_b(B):
    # Lane-dense batch tiles: multiples of 128.  Big tiles amortize the ~0.35 us fixed
    # per-grid-step cost; >= 2 grid steps (when B allows) lets the "parallel" grid axis
    # feed both v7x TensorCores; the cap keeps peak VMEM to a few MB on every chip.
    if B <= 128:
        return 128
    return min(_MAX_TILE_B, _round_up(-(-B // 2), 128))


def mlp_forward(x, w1, w2, b2, w3, *, tile_b=None):
    """Forward pass of MLP(dim, hidden, use_z2=True).

    x: (B, dim) f32; w1: (hidden, dim); w2: (hidden, hidden); b2: (hidden,);
    w3: (1, hidden) or (hidden,).  Returns (B,) f32.
    """
    B, dim = x.shape
    hidden = w1.shape[0]

    if tile_b is None:
        tile_b = _pick_tile_b(B)
    tile_b = max(128, _round_up(tile_b, 128))

    n_tiles = pl.cdiv(B, tile_b)
    Bp = n_tiles * tile_b           # only the OUTPUT is allocated padded; x is not copied

    # Weights are tiny: cast/reshape them once in the wrapper (negligible traffic).
    w1_bf = w1.astype(jnp.bfloat16)                       # (hidden, dim)
    w2_bf = w2.astype(jnp.bfloat16)                       # (hidden, hidden)
    b2_col = b2.reshape(hidden, 1).astype(jnp.float32)    # (hidden, 1)
    w3_col = w3.reshape(hidden, 1).astype(jnp.float32)    # (hidden, 1)

    out = pl.pallas_call(
        mlp_kernel,
        out_shape=jax.ShapeDtypeStruct((1, Bp), jnp.float32),
        grid_spec=pltpu.PrefetchScalarGridSpec(
            num_scalar_prefetch=0,
            grid=(n_tiles,),
            in_specs=[
                pl.BlockSpec((tile_b, dim), lambda i: (i, 0)),      # x (f32, edge clipped)
                pl.BlockSpec((hidden, dim), lambda i: (0, 0)),      # w1 bf16
                pl.BlockSpec((hidden, hidden), lambda i: (0, 0)),   # w2 bf16
                pl.BlockSpec((hidden, 1), lambda i: (0, 0)),        # b2 column f32
                pl.BlockSpec((hidden, 1), lambda i: (0, 0)),        # w3 column f32
            ],
            out_specs=pl.BlockSpec((1, tile_b), lambda i: (0, i)),  # lane-dense row
        ),
        compiler_params=pltpu.CompilerParams(
            dimension_semantics=("parallel",),
            vmem_limit_bytes=32 * 1024 * 1024,
        ),
    )(x, w1_bf, w2_bf, b2_col, w3_col)

    return out[0, :B]


def mlp_forward_ref(x, w1, w2, b2, w3):
    # Mirrors kernel numerics: bf16 matmul operands, f32 accumulation & activations.
    x_bf = x.astype(jnp.bfloat16)
    w1_bf = w1.astype(jnp.bfloat16)
    w2_bf = w2.astype(jnp.bfloat16)
    h1 = _lncosh(jnp.dot(x_bf, w1_bf.T, preferred_element_type=jnp.float32))
    h2 = _softplus(
        jnp.dot(h1.astype(jnp.bfloat16), w2_bf.T, preferred_element_type=jnp.float32)
        + b2.reshape(1, -1)
    )
    return (h2 * w3.reshape(1, -1)).sum(axis=1)


# TODO(synk): MLP.grad / MLP.laplacian (autograd + Hutchinson trace) are not translated;
# only the forward pass is implemented as a Pallas kernel.

if __name__ == "__main__":
    # MLP(dim=16, hidden_size=32, use_z2=True)
    B, dim, hidden = 256, 16, 32
    key = jax.random.PRNGKey(0)
    kx, k1, k2, kb2, k3 = jax.random.split(key, 5)

    x = jax.random.normal(kx, (B, dim), dtype=jnp.float32)

    # deterministic nn.Linear-like uniform init, in PyTorch (out_features, in_features) layout
    def uinit(k, shape, fan_in):
        bound = 1.0 / math.sqrt(fan_in)
        return jax.random.uniform(k, shape, jnp.float32, -bound, bound)

    w1 = uinit(k1, (hidden, dim), dim)          # fc1: dim -> hidden, bias=False (use_z2)
    w2 = uinit(k2, (hidden, hidden), hidden)    # fc2: hidden -> hidden
    b2 = uinit(kb2, (hidden,), hidden)          # fc2 bias
    w3 = uinit(k3, (1, hidden), hidden)         # fc3: hidden -> 1, bias=False

    out = mlp_forward(x, w1, w2, b2, w3)
    jax.block_until_ready(out)
    ref = mlp_forward_ref(x, w1, w2, b2, w3)
    assert out.shape == (B,)
    assert jnp.allclose(out, ref, atol=2e-3, rtol=2e-3), float(jnp.max(jnp.abs(out - ref)))

    # Ragged batch: exercises the cdiv grid with a clipped edge block (no jnp.pad copy).
    B2 = 200
    x2 = x[:B2]
    out2 = mlp_forward(x2, w1, w2, b2, w3)
    jax.block_until_ready(out2)
    ref2 = mlp_forward_ref(x2, w1, w2, b2, w3)
    assert out2.shape == (B2,)
    assert jnp.allclose(out2, ref2, atol=2e-3, rtol=2e-3), float(jnp.max(jnp.abs(out2 - ref2)))

    print("KERNEL_OK")
</pallas_src>

<mosaic_0001>
module attributes {stable_mosaic.version = 11 : i64} {
  func.func @mlp_kernel(%arg0: i32, %arg1: memref<128x16xf32, #tpu.memory_space<vmem>>, %arg2: memref<32x16xbf16, #tpu.memory_space<vmem>>, %arg3: memref<32x32xbf16, #tpu.memory_space<vmem>>, %arg4: memref<32x1xf32, #tpu.memory_space<vmem>>, %arg5: memref<32x1xf32, #tpu.memory_space<vmem>>, %arg6: memref<1x128xf32, #tpu.memory_space<vmem>>) attributes {dimension_semantics = [#tpu.dimension_semantics<parallel>], iteration_bounds = array<i64: 2>, scalar_prefetch = 0 : i64, scratch_operands = 0 : i64, tpu.core_type = #tpu.core_type<tc>, window_params = [{transform_indices = @transform_0, window_bounds = array<i64: 128, 16>}, {pipeline_mode = #tpu.pipeline_mode<synchronous>, transform_indices = @transform_1, window_bounds = array<i64: 32, 16>}, {pipeline_mode = #tpu.pipeline_mode<synchronous>, transform_indices = @transform_2, window_bounds = array<i64: 32, 32>}, {pipeline_mode = #tpu.pipeline_mode<synchronous>, transform_indices = @transform_3, window_bounds = array<i64: 32, 1>}, {pipeline_mode = #tpu.pipeline_mode<synchronous>, transform_indices = @transform_4, window_bounds = array<i64: 32, 1>}, {transform_indices = @transform_5, window_bounds = array<i64: 1, 128>}]} {
    %c0 = arith.constant 0 : index
    %c0_0 = arith.constant 0 : index
    %0 = vector.load %arg1[%c0, %c0_0] : memref<128x16xf32, #tpu.memory_space<vmem>>, vector<128x16xf32>
    %1 = arith.truncf %0 : vector<128x16xf32> to vector<128x16xbf16>
    %c0_1 = arith.constant 0 : index
    %c0_2 = arith.constant 0 : index
    %2 = vector.load %arg2[%c0_1, %c0_2] : memref<32x16xbf16, #tpu.memory_space<vmem>>, vector<32x16xbf16>
    %cst = arith.constant dense<0.000000e+00> : vector<32x128xf32>
    %3 = tpu.matmul %2, %1, %cst {dimension_numbers = #tpu.dot_dimension_numbers<[1], [1], [0], [0], [0, 0, 1, 0], [], []>} : vector<32x16xbf16>, vector<128x16xbf16>, vector<32x128xf32> -> vector<32x128xf32>
    %cst_3 = arith.constant 0.000000e+00 : f32
    %4 = vector.broadcast %cst_3 : f32 to vector<32x128xf32>
    %5 = arith.subf %4, %3 : vector<32x128xf32>
    %cst_4 = arith.constant 2.000000e+00 : f32
    %6 = vector.broadcast %cst_4 : f32 to vector<32x128xf32>
    %7 = arith.mulf %6, %3 : vector<32x128xf32>
    %cst_5 = arith.constant 0.000000e+00 : f32
    %8 = vector.broadcast %cst_5 : f32 to vector<32x128xf32>
    %9 = arith.maximumf %8, %7 : vector<32x128xf32>
    %10 = vector.broadcast %cst_5 : f32 to vector<32x128xf32>
    %11 = arith.subf %10, %7 : vector<32x128xf32>
    %12 = arith.cmpf one, %11, %11 : vector<32x128xf32>
    %13 = vector.broadcast %cst_5 : f32 to vector<32x128xf32>
    %14 = arith.addf %13, %7 : vector<32x128xf32>
    %15 = math.absf %11 : vector<32x128xf32>
    %cst_6 = arith.constant 0.000000e+00 : f32
    %16 = vector.broadcast %cst_6 : f32 to vector<32x128xf32>
    %17 = arith.subf %16, %15 : vector<32x128xf32>
    %18 = math.exp %17 : vector<32x128xf32>
    %19 = math.log1p %18 : vector<32x128xf32>
    %20 = arith.addf %9, %19 : vector<32x128xf32>
    %21 = arith.select %12, %14, %20 : vector<32x128xi1>, vector<32x128xf32>
    %22 = arith.addf %5, %21 : vector<32x128xf32>
    %cst_7 = arith.constant 0.693147182 : f32
    %23 = vector.broadcast %cst_7 : f32 to vector<32x128xf32>
    %24 = arith.subf %22, %23 : vector<32x128xf32>
    %c0_8 = arith.constant 0 : index
    %c0_9 = arith.constant 0 : index
    %25 = vector.load %arg3[%c0_8, %c0_9] : memref<32x32xbf16, #tpu.memory_space<vmem>>, vector<32x32xbf16>
    %26 = arith.truncf %24 : vector<32x128xf32> to vector<32x128xbf16>
    %cst_10 = arith.constant dense<0.000000e+00> : vector<32x128xf32>
    %27 = tpu.matmul %25, %26, %cst_10 {dimension_numbers = #tpu.dot_dimension_numbers<[1], [0], [0], [1], [0, 0, 1, 1], [], []>} : vector<32x32xbf16>, vector<32x128xbf16>, vector<32x128xf32> -> vector<32x128xf32>
    %c0_11 = arith.constant 0 : index
    %c0_12 = arith.constant 0 : index
    %28 = vector.load %arg4[%c0_11, %c0_12] : memref<32x1xf32, #tpu.memory_space<vmem>>, vector<32x1xf32>
    %29 = vector.broadcast %28 : vector<32x1xf32> to vector<32x128xf32>
    %30 = arith.addf %27, %29 : vector<32x128xf32>
    %cst_13 = arith.constant 0.000000e+00 : f32
    %31 = vector.broadcast %cst_13 : f32 to vector<32x128xf32>
    %32 = arith.maximumf %31, %30 : vector<32x128xf32>
    %33 = vector.broadcast %cst_13 : f32 to vector<32x128xf32>
    %34 = arith.subf %33, %30 : vector<32x128xf32>
    %35 = arith.cmpf one, %34, %34 : vector<32x128xf32>
    %36 = vector.broadcast %cst_13 : f32 to vector<32x128xf32>
    %37 = arith.addf %36, %30 : vector<32x128xf32>
    %38 = math.absf %34 : vector<32x128xf32>
    %cst_14 = arith.constant 0.000000e+00 : f32
    %39 = vector.broadcast %cst_14 : f32 to vector<32x128xf32>
    %40 = arith.subf %39, %38 : vector<32x128xf32>
    %41 = math.exp %40 : vector<32x128xf32>
    %42 = math.log1p %41 : vector<32x128xf32>
    %43 = arith.addf %32, %42 : vector<32x128xf32>
    %44 = arith.select %35, %37, %43 : vector<32x128xi1>, vector<32x128xf32>
    %c0_15 = arith.constant 0 : index
    %c0_16 = arith.constant 0 : index
    %45 = vector.load %arg5[%c0_15, %c0_16] : memref<32x1xf32, #tpu.memory_space<vmem>>, vector<32x1xf32>
    %46 = vector.broadcast %45 : vector<32x1xf32> to vector<32x128xf32>
    %47 = arith.mulf %44, %46 : vector<32x128xf32>
    %cst_17 = arith.constant dense<0.000000e+00> : vector<128xf32>
    %48 = vector.multi_reduction <add>, %47, %cst_17 [0] : vector<32x128xf32> to vector<128xf32>
    %49 = vector.shape_cast %48 : vector<128xf32> to vector<1x128xf32>
    %c0_18 = arith.constant 0 : index
    %c0_19 = arith.constant 0 : index
    %50 = vector.load %arg6[%c0_18, %c0_19] : memref<1x128xf32, #tpu.memory_space<vmem>>, vector<1x128xf32>
    tpu.vector_store %arg6[%c0_18, %c0_19], %49 {strides = array<i32>} : memref<1x128xf32, #tpu.memory_space<vmem>>, vector<1x128xf32>,
    return
  }
  func.func @transform_0(%arg0: i32) -> (i32, i32) {
    %c0_i32 = arith.constant 0 : i32
    %c0_i32_0 = arith.constant 0 : i32
    return %arg0, %c0_i32 : i32, i32
  }
  func.func @transform_1(%arg0: i32) -> (i32, i32) {
    %c0_i32 = arith.constant 0 : i32
    %c0_i32_0 = arith.constant 0 : i32
    %c0_i32_1 = arith.constant 0 : i32
    return %c0_i32, %c0_i32_0 : i32, i32
  }
  func.func @transform_2(%arg0: i32) -> (i32, i32) {
    %c0_i32 = arith.constant 0 : i32
    %c0_i32_0 = arith.constant 0 : i32
    %c0_i32_1 = arith.constant 0 : i32
    return %c0_i32, %c0_i32_0 : i32, i32
  }
  func.func @transform_3(%arg0: i32) -> (i32, i32) {
    %c0_i32 = arith.constant 0 : i32
    %c0_i32_0 = arith.constant 0 : i32
    %c0_i32_1 = arith.constant 0 : i32
    return %c0_i32, %c0_i32_0 : i32, i32
  }
  func.func @transform_4(%arg0: i32) -> (i32, i32) {
    %c0_i32 = arith.constant 0 : i32
    %c0_i32_0 = arith.constant 0 : i32
    %c0_i32_1 = arith.constant 0 : i32
    return %c0_i32, %c0_i32_0 : i32, i32
  }
  func.func @transform_5(%arg0: i32) -> (i32, i32) {
    %c0_i32 = arith.constant 0 : i32
    %c0_i32_0 = arith.constant 0 : i32
    return %c0_i32, %arg0 : i32, i32
  }
}

</mosaic_0001>

<llo_original>
// kernel: tpu_custom_call.1
$region0: #{tpu_custom_call.1}
  #allocation0 [shape = 'u32[]', space=smem, size = 0x4, offset = 0x4, fixed_abs, tag = 'smem constant byte address 0x4 - core index']
  #allocation1 [shape = 'u32[144,128]{1,0:T(1,128)}', space=vmem, size = 0x12000, scoped, tag = 'internal scratch']
  %s0 = inlined_call_operand.vmem [shape: f32[256,16], index: 0, kind: input, shape index: {}]
  %s1 = inlined_call_operand.vmem [shape: bf16[32,16], index: 1, kind: input, shape index: {}]
  %s2 = inlined_call_operand.vmem [shape: bf16[32,32], index: 2, kind: input, shape index: {}]
  %s3 = inlined_call_operand.vmem [shape: f32[32,1], index: 3, kind: input, shape index: {}]
  %s4 = inlined_call_operand.vmem [shape: f32[32,1], index: 4, kind: input, shape index: {}]
  %s5 = inlined_call_operand.hbm [shape: f32[1,256], index: 5, kind: output, shape index: {}]
  %s6 = sld [smem:[#allocation0]]
  $region53: #{tpu_custom_call.1} parent=0
    _
  %s8 = ssub.s32 1, %s6
  %s9 = scalar_select 0, %s8, %s6
  $region1: #{tpu_custom_call.1} parent=0
    #allocation2 [shape = 'u8[1024]{0}', space=vmem, size = 0x400, scoped, tag = 'output window, operand 0']
    #allocation3 [shape = 's32[2]{0}', space=sflag, size = 0x8, scoped, tag = 'scoped memory for tpu_custom_call.1']
    %10 = vsyncpa [#allocation3], 0
    %s11 = scalar_lea.sflag [#allocation3], 1
    %12 = vsyncpa %s11, 0
    loop: start=0, step=1, limit=4
    $region2: #{tpu_custom_call.1} parent=1 // loop_pre_header
      _
    $region3: #{tpu_custom_call.1} parent=1 // loop_header
      %s14 = sphi 0, %s18
      %p15 = scmp.ge.s32.totalorder %s14, 4
      %s24 = sphi 0, %s26
      %s27 = sphi 0, %s24
      %s28 = sphi 0, %s27
      %s44 = sphi 0, %s28
      %s48 = sphi 0, %s48
      %s50 = sphi 0, %s48
      %s51 = sphi 0, %s50
      %s65 = sphi 0, %s51
      %s69 = sphi 0, %s69
      %s71 = sphi 0, %s69
      %s72 = sphi 0, %s71
      %s86 = sphi 0, %s72
      %s90 = sphi 0, %s90
      %s92 = sphi 0, %s90
      %s93 = sphi 0, %s92
      %s107 = sphi 0, %s93
      %s111 = sphi 0, %s111
      %s113 = sphi 0, %s111
      %s114 = sphi 0, %s113
      %s128 = sphi 0, %s114
      %s134 = sphi 0, %s136
      %s137 = sphi 0, %s134
      %s138 = sphi 0, %s137
      %s154 = sphi 0, %s138
    $region4: #{tpu_custom_call.1} parent=1 // loop_header_branch
      %17 = sbr.rel (%p15) target = $region8
    $region5: #{tpu_custom_call.1} parent=1 // loop_body
      %s19 = ssub.s32 %s14, 1
      %s20 = ssub.s32 %s14, 2
      %s21 = sadd.s32 %s14, 1
      %s22 = ssub.s32 %s14, %s21
      %p23 = scmp.eq.s32.totalorder %s22, 0
      %s25 = sadd.s32 %s24, 1
      %s26 = scalar_select %p23, %s24, %s25
      %p29 = pneg %p23
      %p30 = scmp.eq.s32.totalorder %s14, 1
      %p31 = por %p29, %p30
      %p32 = scmp.ne.s32.totalorder %s24, %s27
      %p33 = scmp.eq.s32.totalorder %s14, 0
      %p34 = por %p32, %p33
      %p35 = scmp.ne.s32.totalorder %s24, %s27
      %p36 = scmp.eq.s32.totalorder %s19, 1
      %p37 = por %p35, %p36
      %p38 = scmp.ne.s32.totalorder %s27, %s28
      %p39 = scmp.eq.s32.totalorder %s19, 0
      %p40 = por %p38, %p39
      %p41 = scmp.ne.s32.totalorder %s27, %s28
      %p42 = scmp.eq.s32.totalorder %s20, 1
      %p43 = por %p41, %p42
      %p45 = scmp.ne.s32.totalorder %s28, %s44
      %p46 = scmp.eq.s32.totalorder %s20, 0
      %p47 = por %p45, %p46
      %s49 = sadd.s32 %s48, 1
      %p52 = scmp.eq.s32.totalorder %s14, 1
      %p53 = scmp.ne.s32.totalorder %s48, %s50
      %p54 = scmp.eq.s32.totalorder %s14, 0
      %p55 = por %p53, %p54
      %p56 = scmp.ne.s32.totalorder %s48, %s50
      %p57 = scmp.eq.s32.totalorder %s19, 1
      %p58 = por %p56, %p57
      %p59 = scmp.ne.s32.totalorder %s50, %s51
      %p60 = scmp.eq.s32.totalorder %s19, 0
      %p61 = por %p59, %p60
      %p62 = scmp.ne.s32.totalorder %s50, %s51
      %p63 = scmp.eq.s32.totalorder %s20, 1
      %p64 = por %p62, %p63
      %p66 = scmp.ne.s32.totalorder %s51, %s65
      %p67 = scmp.eq.s32.totalorder %s20, 0
      %p68 = por %p66, %p67
      %s70 = sadd.s32 %s69, 1
      %p73 = scmp.eq.s32.totalorder %s14, 1
      %p74 = scmp.ne.s32.totalorder %s69, %s71
      %p75 = scmp.eq.s32.totalorder %s14, 0
      %p76 = por %p74, %p75
      %p77 = scmp.ne.s32.totalorder %s69, %s71
      %p78 = scmp.eq.s32.totalorder %s19, 1
      %p79 = por %p77, %p78
      %p80 = scmp.ne.s32.totalorder %s71, %s72
      %p81 = scmp.eq.s32.totalorder %s19, 0
      %p82 = por %p80, %p81
      %p83 = scmp.ne.s32.totalorder %s71, %s72
      %p84 = scmp.eq.s32.totalorder %s20, 1
      %p85 = por %p83, %p84
      %p87 = scmp.ne.s32.totalorder %s72, %s86
      %p88 = scmp.eq.s32.totalorder %s20, 0
      %p89 = por %p87, %p88
      %s91 = sadd.s32 %s90, 1
      %p94 = scmp.eq.s32.totalorder %s14, 1
      %p95 = scmp.ne.s32.totalorder %s90, %s92
      %p96 = scmp.eq.s32.totalorder %s14, 0
      %p97 = por %p95, %p96
      %p98 = scmp.ne.s32.totalorder %s90, %s92
      %p99 = scmp.eq.s32.totalorder %s19, 1
      %p100 = por %p98, %p99
      %p101 = scmp.ne.s32.totalorder %s92, %s93
      %p102 = scmp.eq.s32.totalorder %s19, 0
      %p103 = por %p101, %p102
      %p104 = scmp.ne.s32.totalorder %s92, %s93
      %p105 = scmp.eq.s32.totalorder %s20, 1
      %p106 = por %p104, %p105
      %p108 = scmp.ne.s32.totalorder %s93, %s107
      %p109 = scmp.eq.s32.totalorder %s20, 0
      %p110 = por %p108, %p109
      %s112 = sadd.s32 %s111, 1
      %p115 = scmp.eq.s32.totalorder %s14, 1
      %p116 = scmp.ne.s32.totalorder %s111, %s113
      %p117 = scmp.eq.s32.totalorder %s14, 0
      %p118 = por %p116, %p117
      %p119 = scmp.ne.s32.totalorder %s111, %s113
      %p120 = scmp.eq.s32.totalorder %s19, 1
      %p121 = por %p119, %p120
      %p122 = scmp.ne.s32.totalorder %s113, %s114
      %p123 = scmp.eq.s32.totalorder %s19, 0
      %p124 = por %p122, %p123
      %p125 = scmp.ne.s32.totalorder %s113, %s114
      %p126 = scmp.eq.s32.totalorder %s20, 1
      %p127 = por %p125, %p126
      %p129 = scmp.ne.s32.totalorder %s114, %s128
      %p130 = scmp.eq.s32.totalorder %s20, 0
      %p131 = por %p129, %p130
      %s132 = ssub.s32 %s14, %s21
      %p133 = scmp.eq.s32.totalorder %s132, 0
      %s135 = sadd.s32 %s134, 1
      %s136 = scalar_select %p133, %s134, %s135
      %p139 = pneg %p133
      %p140 = scmp.eq.s32.totalorder %s14, 1
      %p141 = por %p139, %p140
      %p142 = scmp.ne.s32.totalorder %s134, %s137
      %p143 = scmp.eq.s32.totalorder %s14, 0
      %p144 = por %p142, %p143
      %p145 = scmp.ne.s32.totalorder %s134, %s137
      %p146 = scmp.eq.s32.totalorder %s19, 1
      %p147 = por %p145, %p146
      %p148 = scmp.ne.s32.totalorder %s137, %s138
      %p149 = scmp.eq.s32.totalorder %s19, 0
      %p150 = por %p148, %p149
      %p151 = scmp.ne.s32.totalorder %s137, %s138
      %p152 = scmp.eq.s32.totalorder %s20, 1
      %p153 = por %p151, %p152
      %p155 = scmp.ne.s32.totalorder %s138, %s154
      %p156 = scmp.eq.s32.totalorder %s20, 0
      %p157 = por %p155, %p156
      %p158 = scmp.le.s32.totalorder 1, %s14
      %p159 = scmp.lt.s32.totalorder %s14, 3
      %p160 = pnand %p158, %p159
      %p161 = pneg %p160
      // Predicated region
      $region9: #{tpu_custom_call.1} parent=5 // pred_check
        _
      $region10: #{tpu_custom_call.1} parent=5 // pred_check_branch
        %163 = sbr.rel (%p160) target = $region12
      $region11: #{tpu_custom_call.1} parent=5 // pred_region
        %s164 = ssub.s32 %s14, 1
        // Predicated region
        $region13: #{tpu_custom_call.1} parent=11 // pred_check
          %p165 = pneg %p61
        $region14: #{tpu_custom_call.1} parent=11 // pred_check_branch
          %167 = sbr.rel (%p165) target = $region16
        $region15: #{tpu_custom_call.1} parent=11 // pred_region
          _
        $region16: #{tpu_custom_call.1} parent=11 // pred_fallthru
          _
        // Predicated region
        $region17: #{tpu_custom_call.1} parent=11 // pred_check
          %p168 = pneg %p82
        $region18: #{tpu_custom_call.1} parent=11 // pred_check_branch
          %170 = sbr.rel (%p168) target = $region20
        $region19: #{tpu_custom_call.1} parent=11 // pred_region
          _
        $region20: #{tpu_custom_call.1} parent=11 // pred_fallthru
          _
        // Predicated region
        $region21: #{tpu_custom_call.1} parent=11 // pred_check
          %p171 = pneg %p103
        $region22: #{tpu_custom_call.1} parent=11 // pred_check_branch
          %173 = sbr.rel (%p171) target = $region24
        $region23: #{tpu_custom_call.1} parent=11 // pred_region
          _
        $region24: #{tpu_custom_call.1} parent=11 // pred_fallthru
          _
        // Predicated region
        $region25: #{tpu_custom_call.1} parent=11 // pred_check
          %p174 = pneg %p124
        $region26: #{tpu_custom_call.1} parent=11 // pred_check_branch
          %176 = sbr.rel (%p174) target = $region28
        $region27: #{tpu_custom_call.1} parent=11 // pred_region
          _
        $region28: #{tpu_custom_call.1} parent=11 // pred_fallthru
          _
      $region12: #{tpu_custom_call.1} parent=5 // pred_fallthru
        _
      %p177 = scmp.lt.s32.totalorder %s14, 2
      // Predicated region
      $region29: #{tpu_custom_call.1} parent=5 // pred_check
        %p178 = pneg %p177
      $region30: #{tpu_custom_call.1} parent=5 // pred_check_branch
        %180 = sbr.rel (%p178) target = $region32
      $region31: #{tpu_custom_call.1} parent=5 // pred_region
        // Predicated region
        $region33: #{tpu_custom_call.1} parent=31 // pred_check
          %p181 = pneg %p34
        $region34: #{tpu_custom_call.1} parent=31 // pred_check_branch
          %183 = sbr.rel (%p181) target = $region36
        $region35: #{tpu_custom_call.1} parent=31 // pred_region
          %s184 = smul.u32 16, %s14
          %p185 = scmp.lt.s32.totalorder %s184, 31
          %s186 = scalar_select %p185, %s184, 31
          %s187 = smul.addr %s186, 8
          %s188 = scalar_lea.vmem %s0, %s187
          %s189 = smul.u32 16, %s14
        $region36: #{tpu_custom_call.1} parent=31 // pred_fallthru
          _
      $region32: #{tpu_custom_call.1} parent=5 // pred_fallthru
        _
      %p190 = scmp.le.s32.totalorder 1, %s14
      %p191 = scmp.lt.s32.totalorder %s14, 3
      %p192 = pnand %p190, %p191
      %p193 = pneg %p192
      // Predicated region
      $region37: #{tpu_custom_call.1} parent=5 // pred_check
        _
      $region38: #{tpu_custom_call.1} parent=5 // pred_check_branch
        %195 = sbr.rel (%p192) target = $region40
      $region39: #{tpu_custom_call.1} parent=5 // pred_region
        %s196 = ssub.s32 %s14, 1
        %s197 = smul.u32 16, %s19
        %p198 = scmp.lt.s32.totalorder %s197, 31
        %s199 = scalar_select %p198, %s197, 31
        %s200 = smul.addr %s199, 8
        %s201 = scalar_lea.vmem %s0, %s200
        %p202 = pneg %p40
        %p203 = pneg %p37
        %p204 = pneg %p61
        %p205 = pneg %p58
        %p206 = pneg %p82
        %p207 = pneg %p79
        %p208 = pneg %p103
        %p209 = pneg %p100
        %p210 = pneg %p124
        %p211 = pneg %p121
        %p212 = pneg %p150
        %p213 = pneg %p147
        %s214 = sand.u32 %s137, 1
        %s215 = scalar_lea.sflag [#allocation3], %s214
        %s216 = sand.u32 %s137, 1
        %s217 = scalar_lea.vmem [#allocation2], %s216
        %s218 = smul.u32 16, %s19
        %p219 = scmp.lt.s32.totalorder %s218, 31
        %s220 = scalar_select %p219, %s218, 31
        %s221 = smul.addr %s220, 8
        %s222 = scalar_lea.vmem %s0, %s221
        %s223 = smul.u32 16, %s19
        %v225 = vld [vmem:[%s222] sm:$0xff]
        %v226 = vld [vmem:[%s222 + $0x8] sm:$0xff]
        %v227 = vld [vmem:[%s222 + $0x10] sm:$0xff]
        %v228 = vld [vmem:[%s222 + $0x18] sm:$0xff]
        %v229 = vld [vmem:[%s222 + $0x20] sm:$0xff]
        %v230 = vld [vmem:[%s222 + $0x28] sm:$0xff]
        %v231 = vld [vmem:[%s222 + $0x30] sm:$0xff]
        %v232 = vld [vmem:[%s222 + $0x38] sm:$0xff]
        %v233 = vld [vmem:[%s222 + $0x40] sm:$0xff]
        %v234 = vld [vmem:[%s222 + $0x48] sm:$0xff]
        %v235 = vld [vmem:[%s222 + $0x50] sm:$0xff]
        %v236 = vld [vmem:[%s222 + $0x58] sm:$0xff]
        %v237 = vld [vmem:[%s222 + $0x60] sm:$0xff]
        %v238 = vld [vmem:[%s222 + $0x68] sm:$0xff]
        %v239 = vld [vmem:[%s222 + $0x70] sm:$0xff]
        %v240 = vld [vmem:[%s222 + $0x78] sm:$0xff]
        %v241 = vpack.c.bf16 %v226, %v225
        %v242 = vpack.c.bf16 %v228, %v227
        %v243 = vpack.c.bf16 %v230, %v229
        %v244 = vpack.c.bf16 %v232, %v231
        %v245 = vpack.c.bf16 %v234, %v233
        %v246 = vpack.c.bf16 %v236, %v235
        %v247 = vpack.c.bf16 %v238, %v237
        %v248 = vpack.c.bf16 %v240, %v239
        %v249 = vld [vmem:[%s1] sm:$0xf]
        %v250 = vld [vmem:[%s1 + $0x4] sm:$0xf]
        %v251 = vld [vmem:[%s1 + $0x8] sm:$0xf]
        %v252 = vld [vmem:[%s1 + $0xc] sm:$0xf]
        %v257 = vunpack.c.l.b16 %v249
        %v258 = vunpack.c.l.b16 %v250
        %v259 = vunpack.c.l.b16 %v251
        %v260 = vunpack.c.l.b16 %v252
        %v261 = vpack.c.b16 %v258, %v257
        %v262 = vpack.c.b16 %v260, %v259
        %vm263 = vcmask 130048
        %v265 = vsel %vm263, %v261, 0
        %v268 = vsel %vm263, %v262, 0
        %v271 = vsel %vm263, %v241, 0
        %v274 = vsel %vm263, %v242, 0
        %v277 = vsel %vm263, %v243, 0
        %v280 = vsel %vm263, %v244, 0
        %v283 = vsel %vm263, %v245, 0
        %v286 = vsel %vm263, %v246, 0
        %v289 = vsel %vm263, %v247, 0
        %v292 = vsel %vm263, %v248, 0
        %294 = vmatprep.subr.bf16.mxu0 0
        %295 = vmatpush1.bf16.xpose.msra.mxu0 %v271
        %296 = vmatprep.subr.bf16.mxu0 0
        %297 = vmatpush1.bf16.xpose.msra.mxu0 %v274
        %298 = vmatprep.subr.bf16.mxu0 0
        %299 = vmatpush1.bf16.xpose.msra.mxu0 %v277
        %300 = vmatprep.subr.bf16.mxu0 0
        %301 = vmatpush1.bf16.xpose.msra.mxu0 %v280
        %302 = vmatprep.subr.bf16.mxu0 0
        %303 = vmatpush1.bf16.xpose.msra.mxu0 %v283
        %304 = vmatprep.subr.bf16.mxu0 0
        %305 = vmatpush1.bf16.xpose.msra.mxu0 %v286
        %306 = vmatprep.subr.bf16.mxu0 0
        %307 = vmatpush1.bf16.xpose.msra.mxu0 %v289
        %308 = vmatprep.subr.bf16.mxu0 0
        %309 = vmatpush1.bf16.xpose.msra.mxu0 %v292
        %310 = vmatprep.subr.bf16.mxu0 0
        %311 = vmatpush1.bf16.xpose.msra.mxu0 0
        %312 = vmatprep.subr.bf16.mxu0 0
        %313 = vmatpush1.bf16.xpose.msra.mxu0 0
        %314 = vmatprep.subr.bf16.mxu0 0
        %315 = vmatpush1.bf16.xpose.msra.mxu0 0
        %316 = vmatprep.subr.bf16.mxu0 0
        %317 = vmatpush1.bf16.xpose.msra.mxu0 0
        %318 = vmatprep.subr.bf16.mxu0 0
        %319 = vmatpush1.bf16.xpose.msra.mxu0 0
        %320 = vmatprep.subr.bf16.mxu0 0
        %321 = vmatpush1.bf16.xpose.msra.mxu0 0
        %322 = vmatprep.subr.bf16.mxu0 0
        %323 = vmatpush1.bf16.xpose.msra.mxu0 0
        %324 = vmatprep.subr.bf16.mxu0 0
        %325 = vmatpush1.bf16.xpose.msra.mxu0 0
        %326 = vmatprep.mubr.bf16.mxu0 0
        %327 = vmatmul.mubr.bf16.gmra.mrb[0].mxu0 %v265
        %v328 = vpop.f32.mrb[0].mxu0
        %v329 = vadd.f32 0.0, %v328
        %v330 = vpop.f32.mrb[0].mxu0
        %v331 = vpop.f32.mrb[0].mxu0
        %v332 = vadd.f32 0.0, %v331
        %v333 = vpop.f32.mrb[0].mxu0
        %334 = vmatprep.mubr.bf16.mxu0 0
        %335 = vmatmul.mubr.bf16.gmra.mrb[0].mxu0 %v268
        %v336 = vpop.f32.mrb[0].mxu0
        %v337 = vadd.f32 0.0, %v336
        %v338 = vpop.f32.mrb[0].mxu0
        %v339 = vpop.f32.mrb[0].mxu0
        %v340 = vadd.f32 0.0, %v339
        %v341 = vpop.f32.mrb[0].mxu0
        %342 = vdwg.mxu0
        %v343 = vsub.f32 0.0, %v329
        %v344 = vsub.f32 0.0, %v332
        %v345 = vsub.f32 0.0, %v337
        %v346 = vsub.f32 0.0, %v340
        %v347 = vmul.f32 %v329, 2.0
        %v348 = vmul.f32 %v332, 2.0
        %v349 = vmul.f32 %v337, 2.0
        %v350 = vmul.f32 %v340, 2.0
        %v351 = vmax.f32 %v347, 0.0
        %v352 = vmax.f32 %v348, 0.0
        %v353 = vmax.f32 %v349, 0.0
        %v354 = vmax.f32 %v350, 0.0
        %v355 = vsub.f32 0.0, %v347
        %v356 = vsub.f32 0.0, %v348
        %v357 = vsub.f32 0.0, %v349
        %v358 = vsub.f32 0.0, %v350
        %vm359 = vcmp.ne.f32.partialorder %v355, %v355
        %vm360 = vcmp.ne.f32.partialorder %v356, %v356
        %vm361 = vcmp.ne.f32.partialorder %v357, %v357
        %vm362 = vcmp.ne.f32.partialorder %v358, %v358
        %v363 = vadd.f32 %v347, 0.0
        %v364 = vadd.f32 %v348, 0.0
        %v365 = vadd.f32 %v349, 0.0
        %v366 = vadd.f32 %v350, 0.0
        %v367 = vand.u32 2147483647, %v355
        %v368 = vand.u32 2147483647, %v356
        %v369 = vand.u32 2147483647, %v357
        %v370 = vand.u32 2147483647, %v358
        %v371 = vsub.f32 0.0, %v367
        %v372 = vsub.f32 0.0, %v368
        %v373 = vsub.f32 0.0, %v369
        %v374 = vsub.f32 0.0, %v370
        %v375 = vmul.f32 %v371, 1.442695
        %v376 = vpow.pop %v375
        %v377 = vmul.f32 %v372, 1.442695
        %v378 = vpow.pop %v377
        %v379 = vmul.f32 %v373, 1.442695
        %v380 = vpow.pop %v379
        %v381 = vmul.f32 %v374, 1.442695
        %v382 = vpow.pop %v381
        %v383 = vadd.f32 %v376, 1.0
        %v384 = vlog2.pop %v383
        %v385 = vmul.f32 %v384, 0.6931472
        %v386 = vmul.f32 -0.5, %v376
        %v387 = vadd.f32 %v386, 1.0
        %v388 = vmul.f32 %v387, %v376
        %v389 = vand.u32 2147483647, %v376
        %vm390 = vcmp.lt.f32.partialorder %v389, 0.0004427343
        %v391 = vsel %vm390, %v388, %v385
        %v392 = vadd.f32 %v378, 1.0
        %v393 = vlog2.pop %v392
        %v394 = vmul.f32 %v393, 0.6931472
        %v395 = vmul.f32 -0.5, %v378
        %v396 = vadd.f32 %v395, 1.0
        %v397 = vmul.f32 %v396, %v378
        %v398 = vand.u32 2147483647, %v378
        %vm399 = vcmp.lt.f32.partialorder %v398, 0.0004427343
        %v400 = vsel %vm399, %v397, %v394
        %v401 = vadd.f32 %v380, 1.0
        %v402 = vlog2.pop %v401
        %v403 = vmul.f32 %v402, 0.6931472
        %v404 = vmul.f32 -0.5, %v380
        %v405 = vadd.f32 %v404, 1.0
        %v406 = vmul.f32 %v405, %v380
        %v407 = vand.u32 2147483647, %v380
        %vm408 = vcmp.lt.f32.partialorder %v407, 0.0004427343
        %v409 = vsel %vm408, %v406, %v403
        %v410 = vadd.f32 %v382, 1.0
        %v411 = vlog2.pop %v410
        %v412 = vmul.f32 %v411, 0.6931472
        %v413 = vmul.f32 -0.5, %v382
        %v414 = vadd.f32 %v413, 1.0
        %v415 = vmul.f32 %v414, %v382
        %v416 = vand.u32 2147483647, %v382
        %vm417 = vcmp.lt.f32.partialorder %v416, 0.0004427343
        %v418 = vsel %vm417, %v415, %v412
        %v419 = vadd.f32 %v351, %v391
        %v420 = vadd.f32 %v352, %v400
        %v421 = vadd.f32 %v353, %v409
        %v422 = vadd.f32 %v354, %v418
        %v423 = vsel %vm359, %v363, %v419
        %v424 = vsel %vm360, %v364, %v420
        %v425 = vsel %vm361, %v365, %v421
        %v426 = vsel %vm362, %v366, %v422
        %v427 = vadd.f32 %v343, %v423
        %v428 = vadd.f32 %v344, %v424
        %v429 = vadd.f32 %v345, %v425
        %v430 = vadd.f32 %v346, %v426
        %v431 = vsub.f32 %v427, 0.6931472
        %v432 = vsub.f32 %v428, 0.6931472
        %v433 = vsub.f32 %v429, 0.6931472
        %v434 = vsub.f32 %v430, 0.6931472
        %v435 = vld [vmem:[%s2] sm:$0xf]
        %v436 = vld [vmem:[%s2 + $0x4] sm:$0xf]
        %v437 = vld [vmem:[%s2 + $0x8] sm:$0xf]
        %v438 = vld [vmem:[%s2 + $0xc] sm:$0xf]
        %v439 = vpack.c.bf16 %v432, %v431
        %v440 = vpack.c.bf16 %v434, %v433
        %v441 = vld [vmem:[%s3] sm:$0xff]
        %v442 = vld [vmem:[%s3 + $0x8] sm:$0xff]
        %v443 = vld [vmem:[%s3 + $0x10] sm:$0xff]
        %v444 = vld [vmem:[%s3 + $0x18] sm:$0xff]
        %446 = vset.pattern.permute.xlu0 0
        %447 = vperm.xlu0 %446, %v441
        %v448 = vpop.permute.xlu0 %447
        %451 = vset.pattern.permute.xlu0 0
        %452 = vperm.xlu0 %451, %v442
        %v453 = vpop.permute.xlu0 %452
        %456 = vset.pattern.permute.xlu0 0
        %457 = vperm.xlu0 %456, %v443
        %v458 = vpop.permute.xlu0 %457
        %461 = vset.pattern.permute.xlu0 0
        %462 = vperm.xlu0 %461, %v444
        %v463 = vpop.permute.xlu0 %462
        %v469 = vunpack.c.l.b16 %v435
        %v470 = vunpack.c.l.b16 %v436
        %v471 = vunpack.c.l.b16 %v437
        %v472 = vunpack.c.l.b16 %v438
        %v473 = vpack.c.b16 %v470, %v469
        %v474 = vpack.c.b16 %v472, %v471
        %vm475 = vcmask 261120
        %v477 = vsel %vm475, %v473, 0
        %v480 = vsel %vm475, %v474, 0
        %482 = vmatprep.subr.bf16.mxu0 0
        %483 = vmatpush1.bf16.msra.mxu0 %v439
        %484 = vmatprep.subr.bf16.mxu0 0
        %485 = vmatpush1.bf16.msra.mxu0 %v440
        %486 = vmatprep.subr.bf16.mxu0 0
        %487 = vmatpush1.bf16.msra.mxu0 0
        %488 = vmatprep.subr.bf16.mxu0 0
        %489 = vmatpush1.bf16.msra.mxu0 0
        %490 = vmatprep.subr.bf16.mxu0 0
        %491 = vmatpush1.bf16.msra.mxu0 0
        %492 = vmatprep.subr.bf16.mxu0 0
        %493 = vmatpush1.bf16.msra.mxu0 0
        %494 = vmatprep.subr.bf16.mxu0 0
        %495 = vmatpush1.bf16.msra.mxu0 0
        %496 = vmatprep.subr.bf16.mxu0 0
        %497 = vmatpush1.bf16.msra.mxu0 0
        %498 = vmatprep.subr.bf16.mxu0 0
        %499 = vmatpush1.bf16.msra.mxu0 0
        %500 = vmatprep.subr.bf16.mxu0 0
        %501 = vmatpush1.bf16.msra.mxu0 0
        %502 = vmatprep.subr.bf16.mxu0 0
        %503 = vmatpush1.bf16.msra.mxu0 0
        %504 = vmatprep.subr.bf16.mxu0 0
        %505 = vmatpush1.bf16.msra.mxu0 0
        %506 = vmatprep.subr.bf16.mxu0 0
        %507 = vmatpush1.bf16.msra.mxu0 0
        %508 = vmatprep.subr.bf16.mxu0 0
        %509 = vmatpush1.bf16.msra.mxu0 0
        %510 = vmatprep.subr.bf16.mxu0 0
        %511 = vmatpush1.bf16.msra.mxu0 0
        %512 = vmatprep.subr.bf16.mxu0 0
        %513 = vmatpush1.bf16.msra.mxu0 0
        %514 = vmatprep.mubr.bf16.mxu0 0
        %515 = vmatmul.mubr.bf16.gmra.mrb[0].mxu0 %v477
        %v516 = vpop.f32.mrb[0].mxu0
        %v517 = vadd.f32 %v448, %v516
        %v518 = vpop.f32.mrb[0].mxu0
        %v519 = vpop.f32.mrb[0].mxu0
        %v520 = vadd.f32 %v453, %v519
        %v521 = vpop.f32.mrb[0].mxu0
        %522 = vmatprep.mubr.bf16.mxu0 0
        %523 = vmatmul.mubr.bf16.gmra.mrb[0].mxu0 %v480
        %v524 = vpop.f32.mrb[0].mxu0
        %v525 = vadd.f32 %v458, %v524
        %v526 = vpop.f32.mrb[0].mxu0
        %v527 = vpop.f32.mrb[0].mxu0
        %v528 = vadd.f32 %v463, %v527
        %v529 = vpop.f32.mrb[0].mxu0
        %530 = vdwg.mxu0
        %v531 = vmax.f32 %v517, 0.0
        %v532 = vmax.f32 %v520, 0.0
        %v533 = vmax.f32 %v525, 0.0
        %v534 = vmax.f32 %v528, 0.0
        %v535 = vsub.f32 0.0, %v517
        %v536 = vsub.f32 0.0, %v520
        %v537 = vsub.f32 0.0, %v525
        %v538 = vsub.f32 0.0, %v528
        %vm539 = vcmp.ne.f32.partialorder %v535, %v535
        %vm540 = vcmp.ne.f32.partialorder %v536, %v536
        %vm541 = vcmp.ne.f32.partialorder %v537, %v537
        %vm542 = vcmp.ne.f32.partialorder %v538, %v538
        %v543 = vadd.f32 %v517, 0.0
        %v544 = vadd.f32 %v520, 0.0
        %v545 = vadd.f32 %v525, 0.0
        %v546 = vadd.f32 %v528, 0.0
        %v547 = vand.u32 2147483647, %v535
        %v548 = vand.u32 2147483647, %v536
        %v549 = vand.u32 2147483647, %v537
        %v550 = vand.u32 2147483647, %v538
        %v551 = vsub.f32 0.0, %v547
        %v552 = vsub.f32 0.0, %v548
        %v553 = vsub.f32 0.0, %v549
        %v554 = vsub.f32 0.0, %v550
        %v555 = vmul.f32 %v551, 1.442695
        %v556 = vpow.pop %v555
        %v557 = vmul.f32 %v552, 1.442695
        %v558 = vpow.pop %v557
        %v559 = vmul.f32 %v553, 1.442695
        %v560 = vpow.pop %v559
        %v561 = vmul.f32 %v554, 1.442695
        %v562 = vpow.pop %v561
        %v563 = vadd.f32 %v556, 1.0
        %v564 = vlog2.pop %v563
        %v565 = vmul.f32 %v564, 0.6931472
        %v566 = vmul.f32 -0.5, %v556
        %v567 = vadd.f32 %v566, 1.0
        %v568 = vmul.f32 %v567, %v556
        %v569 = vand.u32 2147483647, %v556
        %vm570 = vcmp.lt.f32.partialorder %v569, 0.0004427343
        %v571 = vsel %vm570, %v568, %v565
        %v572 = vadd.f32 %v558, 1.0
        %v573 = vlog2.pop %v572
        %v574 = vmul.f32 %v573, 0.6931472
        %v575 = vmul.f32 -0.5, %v558
        %v576 = vadd.f32 %v575, 1.0
        %v577 = vmul.f32 %v576, %v558
        %v578 = vand.u32 2147483647, %v558
        %vm579 = vcmp.lt.f32.partialorder %v578, 0.0004427343
        %v580 = vsel %vm579, %v577, %v574
        %v581 = vadd.f32 %v560, 1.0
        %v582 = vlog2.pop %v581
        %v583 = vmul.f32 %v582, 0.6931472
        %v584 = vmul.f32 -0.5, %v560
        %v585 = vadd.f32 %v584, 1.0
        %v586 = vmul.f32 %v585, %v560
        %v587 = vand.u32 2147483647, %v560
        %vm588 = vcmp.lt.f32.partialorder %v587, 0.0004427343
        %v589 = vsel %vm588, %v586, %v583
        %v590 = vadd.f32 %v562, 1.0
        %v591 = vlog2.pop %v590
        %v592 = vmul.f32 %v591, 0.6931472
        %v593 = vmul.f32 -0.5, %v562
        %v594 = vadd.f32 %v593, 1.0
        %v595 = vmul.f32 %v594, %v562
        %v596 = vand.u32 2147483647, %v562
        %vm597 = vcmp.lt.f32.partialorder %v596, 0.0004427343
        %v598 = vsel %vm597, %v595, %v592
        %v599 = vadd.f32 %v531, %v571
        %v600 = vadd.f32 %v532, %v580
        %v601 = vadd.f32 %v533, %v589
        %v602 = vadd.f32 %v534, %v598
        %v603 = vsel %vm539, %v543, %v599
        %v604 = vsel %vm540, %v544, %v600
        %v605 = vsel %vm541, %v545, %v601
        %v606 = vsel %vm542, %v546, %v602
        %v607 = vld [vmem:[%s4] sm:$0xff]
        %v608 = vld [vmem:[%s4 + $0x8] sm:$0xff]
        %v609 = vld [vmem:[%s4 + $0x10] sm:$0xff]
        %v610 = vld [vmem:[%s4 + $0x18] sm:$0xff]
        %612 = vset.pattern.permute.xlu0 0
        %613 = vperm.xlu0 %612, %v607
        %v614 = vpop.permute.xlu0 %613
        %617 = vset.pattern.permute.xlu0 0
        %618 = vperm.xlu0 %617, %v608
        %v619 = vpop.permute.xlu0 %618
        %622 = vset.pattern.permute.xlu0 0
        %623 = vperm.xlu0 %622, %v609
        %v624 = vpop.permute.xlu0 %623
        %627 = vset.pattern.permute.xlu0 0
        %628 = vperm.xlu0 %627, %v610
        %v629 = vpop.permute.xlu0 %628
        %v631 = vmul.f32 %v603, %v614
        %v632 = vmul.f32 %v604, %v619
        %v633 = vmul.f32 %v605, %v624
        %v634 = vmul.f32 %v606, %v629
        %v635 = vadd.f32 %v631, %v632
        %v636 = vadd.f32 %v635, %v633
        %v637 = vadd.f32 %v636, %v634
        %v638 = vrot.slane %v637, 4
        %v639 = vadd.f32 %v637, %v638
        %v640 = vrot.slane %v639, 2
        %v641 = vadd.f32 %v639, %v640
        %v642 = vrot.slane %v641, 1
        %v643 = vadd.f32 %v641, %v642
        %644 = vst [vmem:[%s217] sm:$0x1] %v643
        %s645 = sand.u32 %s137, 1
        %s646 = scalar_lea.sflag [#allocation3], %s645
        %s647 = sand.u32 %s137, 1
        %s648 = scalar_lea.vmem [#allocation2], %s647
        // Predicated region
        $region41: #{tpu_custom_call.1} parent=39 // pred_check
          %p649 = pneg %p147
        $region42: #{tpu_custom_call.1} parent=39 // pred_check_branch
          %651 = sbr.rel (%p649) target = $region44
        $region43: #{tpu_custom_call.1} parent=39 // pred_region
          %s653 = ssub.s32 16, 16
          %654 = vsyncadd %s646, %s653
          %s655 = smul.addr %s19, 16
          %s656 = scalar_lea.hbm %s5, %s655
          %s658 = sshll.u32 %s648, 4
          %s659 = int_to_ptr.vmem [resolvable:$true] %s658
          %661 = dma.vmem_to_hbm [thread:$0]  %s659, 16, %s656, %s646
        $region44: #{tpu_custom_call.1} parent=39 // pred_fallthru
          _
      $region40: #{tpu_custom_call.1} parent=5 // pred_fallthru
        _
      %p662 = scmp.le.s32.totalorder 2, %s14
      // Predicated region
      $region45: #{tpu_custom_call.1} parent=5 // pred_check
        %p663 = pneg %p662
      $region46: #{tpu_custom_call.1} parent=5 // pred_check_branch
        %665 = sbr.rel (%p663) target = $region48
      $region47: #{tpu_custom_call.1} parent=5 // pred_region
        %s666 = ssub.s32 %s14, 2
        // Predicated region
        $region49: #{tpu_custom_call.1} parent=47 // pred_check
          %p667 = pneg %p153
        $region50: #{tpu_custom_call.1} parent=47 // pred_check_branch
          %669 = sbr.rel (%p667) target = $region52
        $region51: #{tpu_custom_call.1} parent=47 // pred_region
          %s670 = sand.u32 %s138, 1
          %s671 = scalar_lea.sflag [#allocation3], %s670
          %s672 = sand.u32 %s138, 1
          %s673 = scalar_lea.vmem [#allocation2], %s672
          %674 = dma.done %s671, 16
        $region52: #{tpu_custom_call.1} parent=47 // pred_fallthru
          _
      $region48: #{tpu_custom_call.1} parent=5 // pred_fallthru
        _
    $region6: #{tpu_custom_call.1} parent=1 // loop_footer
      %s18 = sadd.s32 1, %s14
    $region7: #{tpu_custom_call.1} parent=1 // loop_footer_branch
      %13 = sbr.rel target = $region3
    $region8: #{tpu_custom_call.1} parent=1 // loop_exit
      _
    %675 = vsyncpa [#allocation3], 1
    %s676 = scalar_lea.sflag [#allocation3], 1
    %677 = vsyncpa %s676, 1

</llo_original>
